<compile_context>
chip_gen: v6e
topology: v6e:2x2x1
jax: 0.10.0
libtpu: 0.0.40
codegen_flags: <defaults>
</compile_context>

<pallas_src>
import functools

import numpy as np
import jax
import jax.numpy as jnp
from jax.experimental import pallas as pl
from jax.experimental.pallas import tpu as pltpu


def _elu(v):
    # ELU(alpha=1). Clamp exp argument so the unselected branch cannot overflow.
    return jnp.where(v > 0, v, jnp.exp(jnp.minimum(v, 0.0)) - 1.0)


# ------- Kernel 1: 3x3 conv2d (single MXU matmul, taps folded into K) + GN + ELU ----
def _conv2d_gn_elu_kernel(x_ref, w_ref, b_ref, gamma_ref, beta_ref, p_ref, o_ref,
                          *, HW, Cpg, eps):
    # x_ref block: (1, 9*Cin, HW); w_ref: (Cout, 9*Cin); column params: (Cout, 1);
    # p_ref: (Cout, Cout) group-membership matrix (only used when Cpg > 1).
    acc = jnp.dot(w_ref[...], x_ref[0],
                  preferred_element_type=jnp.float32)          # (Cout, HW) on MXU
    acc = acc + b_ref[...]                                     # (Cout, 1) lane-broadcast

    inv_n = 1.0 / float(HW * Cpg)
    sums = jnp.sum(acc, axis=1, keepdims=True)                 # (Cout, 1) lane reduce
    if Cpg == 1:                                               # GroupNorm degenerates
        mean = sums * inv_n
    else:
        mean = jnp.dot(p_ref[...], sums, preferred_element_type=jnp.float32) * inv_n
    d = acc - mean
    sq = jnp.sum(d * d, axis=1, keepdims=True)                 # two-pass variance
    if Cpg == 1:
        var = sq * inv_n
    else:
        var = jnp.dot(p_ref[...], sq, preferred_element_type=jnp.float32) * inv_n
    inv = jax.lax.rsqrt(var + eps)
    y = d * (inv * gamma_ref[...]) + beta_ref[...]
    o_ref[0] = _elu(y).astype(o_ref.dtype)


# ------- Kernel 2: 3x3x3 conv3d (1 -> Co3 channels) as one banded MXU matmul + ELU --
def _conv3d_elu_kernel(slab_ref, w_ref, b_ref, o_ref):
    # slab_ref block: (1, 9*(D+2), HW); w_ref: (Co3*D, 9*(D+2)); b_ref: (Co3*D, 1).
    acc = jnp.dot(w_ref[...], slab_ref[0],
                  preferred_element_type=jnp.float32)          # (Co3*D, HW) on MXU
    acc = acc + b_ref[...]
    o_ref[0] = _elu(acc).astype(o_ref.dtype)


# ---------------------------------- wrapper -----------------------------------------
def unpack_block_forward(x, params):
    """x: (N, Cin, H, W) float32 NCHW. Returns (N, Cout, 2H, 2W) NCHW."""
    w2, b2, gamma, beta, w3, b3 = (params[k] for k in
                                   ("w2", "b2", "gamma", "beta", "w3", "b3"))
    N, Cin, H, W = x.shape
    Cout = w2.shape[0]
    Co3 = w3.shape[0]
    G = 16
    assert Cout % G == 0, "GroupNorm requires Cout % 16 == 0"
    Cpg = Cout // G
    HW = H * W
    D = Cout

    # glue (layout only): reflection pad + im2col with the 9 taps folded into K.
    xp = jnp.pad(x, ((0, 0), (0, 0), (1, 1), (1, 1)), mode="reflect")
    taps = jnp.concatenate(
        [xp[:, :, dy:dy + H, dx:dx + W].reshape(N, Cin, HW)
         for dy in range(3) for dx in range(3)], axis=1)            # (N, 9*Cin, HW)
    w2k = jnp.transpose(w2, (0, 2, 3, 1)).reshape(Cout, 9 * Cin)    # tap-major K
    ch = jnp.arange(Cout)
    Pg = (ch[:, None] // Cpg == ch[None, :] // Cpg).astype(jnp.float32)  # (Cout, Cout)

    # TODO(synk): at real resolutions (H*W >> 256) add an HW-tiling grid axis (two-pass
    # GroupNorm) and set vmem_limit_bytes; at this test size full-HW blocks fit easily.
    k1 = functools.partial(_conv2d_gn_elu_kernel, HW=HW, Cpg=Cpg, eps=1e-10)
    y = pl.pallas_call(
        k1,
        out_shape=jax.ShapeDtypeStruct((N, Cout, HW), jnp.float32),
        grid=(N,),
        in_specs=[
            pl.BlockSpec((1, 9 * Cin, HW), lambda n: (n, 0, 0)),
            pl.BlockSpec((Cout, 9 * Cin), lambda n: (0, 0)),
            pl.BlockSpec((Cout, 1), lambda n: (0, 0)),
            pl.BlockSpec((Cout, 1), lambda n: (0, 0)),
            pl.BlockSpec((Cout, 1), lambda n: (0, 0)),
            pl.BlockSpec((Cout, Cout), lambda n: (0, 0)),
        ],
        out_specs=pl.BlockSpec((1, Cout, HW), lambda n: (n, 0, 0)),
        compiler_params=pltpu.CompilerParams(dimension_semantics=("parallel",)),
    )(taps, w2k, b2.reshape(Cout, 1), gamma.reshape(Cout, 1), beta.reshape(Cout, 1), Pg)

    # glue (layout only): ReplicationPad3d(1) + nine (kh,kw)-shifted slabs, flattened
    # to a lane-dense (9*(D+2), HW) contraction operand for the banded conv3d matmul.
    vol_p = jnp.pad(y.reshape(N, Cout, H, W),
                    ((0, 0), (1, 1), (1, 1), (1, 1)), mode="edge")   # (N, D+2, H+2, W+2)
    slabs = jnp.concatenate(
        [vol_p[:, :, kh:kh + H, kw:kw + W].reshape(N, D + 2, HW)
         for kh in range(3) for kw in range(3)], axis=1)             # (N, 9*(D+2), HW)

    # Banded conv3d weights: row co*D+d, column t*(D+2)+d+kd holds w3[co,0,kd,kh,kw].
    w3r = w3.reshape(Co3, 3, 3, 3)                                   # (co, kd, kh, kw)
    bands = [jnp.eye(D, D + 2, k=kd, dtype=jnp.float32) for kd in range(3)]
    blocks = []
    for kh in range(3):
        for kw in range(3):
            blk = sum(w3r[:, kd, kh, kw][:, None, None] * bands[kd][None]
                      for kd in range(3))                            # (Co3, D, D+2)
            blocks.append(blk.reshape(Co3 * D, D + 2))
    w3band = jnp.concatenate(blocks, axis=1)                         # (Co3*D, 9*(D+2))
    b3rows = jnp.repeat(b3, D).reshape(Co3 * D, 1)

    z = pl.pallas_call(
        _conv3d_elu_kernel,
        out_shape=jax.ShapeDtypeStruct((N, Co3 * D, HW), jnp.float32),
        grid=(N,),
        in_specs=[
            pl.BlockSpec((1, 9 * (D + 2), HW), lambda n: (n, 0, 0)),
            pl.BlockSpec((Co3 * D, 9 * (D + 2)), lambda n: (0, 0)),
            pl.BlockSpec((Co3 * D, 1), lambda n: (0, 0)),
        ],
        out_specs=pl.BlockSpec((1, Co3 * D, HW), lambda n: (n, 0, 0)),
        compiler_params=pltpu.CompilerParams(dimension_semantics=("parallel",)),
    )(slabs, w3band, b3rows)

    # glue: DepthToSpace(block_size=2), pure view/permute exactly like the PyTorch module.
    out = (z.reshape(N, 2, 2, Cout, H, W)
             .transpose(0, 3, 4, 1, 5, 2)
             .reshape(N, Cout, 2 * H, 2 * W))
    return out


# ------------------------------ deterministic params --------------------------------
def init_params(key, in_channels, out_channels):
    conv3d_channels = 4
    cout = int(4 * out_channels / conv3d_channels)
    k = jax.random.split(key, 4)
    bnd2 = 1.0 / np.sqrt(in_channels * 9)
    w2 = jax.random.uniform(k[0], (cout, in_channels, 3, 3), jnp.float32, -bnd2, bnd2)
    b2 = jax.random.uniform(k[1], (cout,), jnp.float32, -bnd2, bnd2)
    gamma = jnp.ones((cout,), jnp.float32)
    beta = jnp.zeros((cout,), jnp.float32)
    bnd3 = 1.0 / np.sqrt(27.0)
    w3 = jax.random.uniform(k[2], (conv3d_channels, 1, 3, 3, 3), jnp.float32, -bnd3, bnd3)
    b3 = jax.random.uniform(k[3], (conv3d_channels,), jnp.float32, -bnd3, bnd3)
    return dict(w2=w2, b2=b2, gamma=gamma, beta=beta, w3=w3, b3=b3)


# ------------------------------ pure-JAX reference -----------------------------------
def _reference_forward(x, params):
    w2, b2, gamma, beta, w3, b3 = (params[k] for k in
                                   ("w2", "b2", "gamma", "beta", "w3", "b3"))
    xp = jnp.pad(x, ((0, 0), (0, 0), (1, 1), (1, 1)), mode="reflect")
    y = jax.lax.conv_general_dilated(xp, w2, (1, 1), "VALID",
                                     dimension_numbers=("NCHW", "OIHW", "NCHW"),
                                     precision=jax.lax.Precision.HIGHEST)
    y = y + b2[None, :, None, None]
    N, C, H, W = y.shape
    G = 16
    yg = y.reshape(N, G, C // G, H, W)
    mean = yg.mean(axis=(2, 3, 4), keepdims=True)
    var = yg.var(axis=(2, 3, 4), keepdims=True)
    yn = ((yg - mean) / jnp.sqrt(var + 1e-10)).reshape(N, C, H, W)
    yn = yn * gamma[None, :, None, None] + beta[None, :, None, None]
    yn = jax.nn.elu(yn)
    v = jnp.pad(yn[:, None], ((0, 0), (0, 0), (1, 1), (1, 1), (1, 1)), mode="edge")
    z = jax.lax.conv_general_dilated(v, w3, (1, 1, 1), "VALID",
                                     dimension_numbers=("NCDHW", "OIDHW", "NCDHW"),
                                     precision=jax.lax.Precision.HIGHEST)
    z = jax.nn.elu(z + b3[None, :, None, None, None]).reshape(N, 4 * C, H, W)
    return (z.reshape(N, 2, 2, C, H, W)
              .transpose(0, 3, 4, 1, 5, 2)
              .reshape(N, C, 2 * H, 2 * W))


if __name__ == "__main__":
    key = jax.random.PRNGKey(0)
    kx, kp = jax.random.split(key)
    N, Cin, H, W = 2, 4, 16, 16
    out_channels = 16                 # Cout = 4*out_channels/4 = 16 (divisible by 16 groups)
    x = jax.random.normal(kx, (N, Cin, H, W), jnp.float32)
    params = init_params(kp, Cin, out_channels)

    out = jax.jit(unpack_block_forward)(x, params)
    out = jax.block_until_ready(out)
    assert out.shape == (N, out_channels, 2 * H, 2 * W), out.shape

    ref = _reference_forward(x, params)
    # Kernel matmuls use default MXU precision (bf16 multiply, f32 accumulate) vs the
    # f32 HIGHEST-precision reference, so the tolerance is set at bf16-roundoff level.
    np.testing.assert_allclose(np.asarray(out), np.asarray(ref), rtol=2e-2, atol=2e-2)
    print("KERNEL_OK")
</pallas_src>

<mosaic_0001>
module attributes {stable_mosaic.version = 11 : i64} {
  func.func @_conv2d_gn_elu_kernel(%arg0: i32, %arg1: memref<1x36x256xf32, #tpu.memory_space<vmem>>, %arg2: memref<16x36xf32, #tpu.memory_space<vmem>>, %arg3: memref<16x1xf32, #tpu.memory_space<vmem>>, %arg4: memref<16x1xf32, #tpu.memory_space<vmem>>, %arg5: memref<16x1xf32, #tpu.memory_space<vmem>>, %arg6: memref<16x16xf32, #tpu.memory_space<vmem>>, %arg7: memref<1x16x256xf32, #tpu.memory_space<vmem>>) attributes {dimension_semantics = [#tpu.dimension_semantics<parallel>], iteration_bounds = array<i64: 2>, scalar_prefetch = 0 : i64, scratch_operands = 0 : i64, tpu.core_type = #tpu.core_type<tc>, window_params = [{transform_indices = @transform_0, window_bounds = array<i64: 1, 36, 256>}, {pipeline_mode = #tpu.pipeline_mode<synchronous>, transform_indices = @transform_1, window_bounds = array<i64: 16, 36>}, {pipeline_mode = #tpu.pipeline_mode<synchronous>, transform_indices = @transform_2, window_bounds = array<i64: 16, 1>}, {pipeline_mode = #tpu.pipeline_mode<synchronous>, transform_indices = @transform_3, window_bounds = array<i64: 16, 1>}, {pipeline_mode = #tpu.pipeline_mode<synchronous>, transform_indices = @transform_4, window_bounds = array<i64: 16, 1>}, {pipeline_mode = #tpu.pipeline_mode<synchronous>, transform_indices = @transform_5, window_bounds = array<i64: 16, 16>}, {transform_indices = @transform_6, window_bounds = array<i64: 1, 16, 256>}]} {
    %c0 = arith.constant 0 : index
    %c0_0 = arith.constant 0 : index
    %0 = vector.load %arg2[%c0, %c0_0] : memref<16x36xf32, #tpu.memory_space<vmem>>, vector<16x36xf32>
    %c0_1 = arith.constant 0 : index
    %c0_2 = arith.constant 0 : index
    %c0_3 = arith.constant 0 : index
    %1 = vector.load %arg1[%c0_1, %c0_2, %c0_3] : memref<1x36x256xf32, #tpu.memory_space<vmem>>, vector<1x36x256xf32>
    %2 = vector.shape_cast %1 : vector<1x36x256xf32> to vector<36x256xf32>
    %cst = arith.constant dense<0.000000e+00> : vector<16x256xf32>
    %3 = tpu.matmul %0, %2, %cst {dimension_numbers = #tpu.dot_dimension_numbers<[1], [0], [0], [1], [0, 0, 1, 1], [], []>} : vector<16x36xf32>, vector<36x256xf32>, vector<16x256xf32> -> vector<16x256xf32>
    %c0_4 = arith.constant 0 : index
    %c0_5 = arith.constant 0 : index
    %4 = vector.load %arg3[%c0_4, %c0_5] : memref<16x1xf32, #tpu.memory_space<vmem>>, vector<16x1xf32>
    %5 = vector.broadcast %4 : vector<16x1xf32> to vector<16x256xf32>
    %6 = arith.addf %3, %5 : vector<16x256xf32>
    %cst_6 = arith.constant dense<0.000000e+00> : vector<16xf32>
    %7 = vector.multi_reduction <add>, %6, %cst_6 [1] : vector<16x256xf32> to vector<16xf32>
    %8 = vector.shape_cast %7 : vector<16xf32> to vector<16x1xf32>
    %cst_7 = arith.constant 3.906250e-03 : f32
    %9 = vector.broadcast %cst_7 : f32 to vector<16x1xf32>
    %10 = arith.mulf %8, %9 : vector<16x1xf32>
    %11 = vector.broadcast %10 : vector<16x1xf32> to vector<16x256xf32>
    %12 = arith.subf %6, %11 : vector<16x256xf32>
    %13 = arith.mulf %12, %12 : vector<16x256xf32>
    %cst_8 = arith.constant dense<0.000000e+00> : vector<16xf32>
    %14 = vector.multi_reduction <add>, %13, %cst_8 [1] : vector<16x256xf32> to vector<16xf32>
    %15 = vector.shape_cast %14 : vector<16xf32> to vector<16x1xf32>
    %cst_9 = arith.constant 3.906250e-03 : f32
    %16 = vector.broadcast %cst_9 : f32 to vector<16x1xf32>
    %17 = arith.mulf %15, %16 : vector<16x1xf32>
    %cst_10 = arith.constant 1.000000e-10 : f32
    %18 = vector.broadcast %cst_10 : f32 to vector<16x1xf32>
    %19 = arith.addf %17, %18 : vector<16x1xf32>
    %20 = math.rsqrt %19 : vector<16x1xf32>
    %c0_11 = arith.constant 0 : index
    %c0_12 = arith.constant 0 : index
    %21 = vector.load %arg4[%c0_11, %c0_12] : memref<16x1xf32, #tpu.memory_space<vmem>>, vector<16x1xf32>
    %22 = arith.mulf %20, %21 : vector<16x1xf32>
    %23 = vector.broadcast %22 : vector<16x1xf32> to vector<16x256xf32>
    %24 = arith.mulf %12, %23 : vector<16x256xf32>
    %c0_13 = arith.constant 0 : index
    %c0_14 = arith.constant 0 : index
    %25 = vector.load %arg5[%c0_13, %c0_14] : memref<16x1xf32, #tpu.memory_space<vmem>>, vector<16x1xf32>
    %26 = vector.broadcast %25 : vector<16x1xf32> to vector<16x256xf32>
    %27 = arith.addf %24, %26 : vector<16x256xf32>
    %cst_15 = arith.constant 0.000000e+00 : f32
    %28 = vector.broadcast %cst_15 : f32 to vector<16x256xf32>
    %29 = arith.cmpf ogt, %27, %28 : vector<16x256xf32>
    %cst_16 = arith.constant 0.000000e+00 : f32
    %30 = vector.broadcast %cst_16 : f32 to vector<16x256xf32>
    %31 = arith.minimumf %27, %30 : vector<16x256xf32>
    %32 = math.exp %31 : vector<16x256xf32>
    %cst_17 = arith.constant 1.000000e+00 : f32
    %33 = vector.broadcast %cst_17 : f32 to vector<16x256xf32>
    %34 = arith.subf %32, %33 : vector<16x256xf32>
    %35 = arith.select %29, %27, %34 : vector<16x256xi1>, vector<16x256xf32>
    %c0_18 = arith.constant 0 : index
    %c0_19 = arith.constant 0 : index
    %c0_20 = arith.constant 0 : index
    %36 = vector.load %arg7[%c0_18, %c0_19, %c0_20] : memref<1x16x256xf32, #tpu.memory_space<vmem>>, vector<1x16x256xf32>
    %37 = vector.shape_cast %36 : vector<1x16x256xf32> to vector<16x256xf32>
    %38 = vector.shape_cast %35 : vector<16x256xf32> to vector<1x16x256xf32>
    tpu.vector_store %arg7[%c0_18, %c0_19, %c0_20], %38 {strides = array<i32>} : memref<1x16x256xf32, #tpu.memory_space<vmem>>, vector<1x16x256xf32>,
    return
  }
  func.func @transform_0(%arg0: i32) -> (i32, i32, i32) {
    %c0_i32 = arith.constant 0 : i32
    %c0_i32_0 = arith.constant 0 : i32
    %c0_i32_1 = arith.constant 0 : i32
    return %arg0, %c0_i32, %c0_i32_0 : i32, i32, i32
  }
  func.func @transform_1(%arg0: i32) -> (i32, i32) {
    %c0_i32 = arith.constant 0 : i32
    %c0_i32_0 = arith.constant 0 : i32
    %c0_i32_1 = arith.constant 0 : i32
    return %c0_i32, %c0_i32_0 : i32, i32
  }
  func.func @transform_2(%arg0: i32) -> (i32, i32) {
    %c0_i32 = arith.constant 0 : i32
    %c0_i32_0 = arith.constant 0 : i32
    %c0_i32_1 = arith.constant 0 : i32
    return %c0_i32, %c0_i32_0 : i32, i32
  }
  func.func @transform_3(%arg0: i32) -> (i32, i32) {
    %c0_i32 = arith.constant 0 : i32
    %c0_i32_0 = arith.constant 0 : i32
    %c0_i32_1 = arith.constant 0 : i32
    return %c0_i32, %c0_i32_0 : i32, i32
  }
  func.func @transform_4(%arg0: i32) -> (i32, i32) {
    %c0_i32 = arith.constant 0 : i32
    %c0_i32_0 = arith.constant 0 : i32
    %c0_i32_1 = arith.constant 0 : i32
    return %c0_i32, %c0_i32_0 : i32, i32
  }
  func.func @transform_5(%arg0: i32) -> (i32, i32) {
    %c0_i32 = arith.constant 0 : i32
    %c0_i32_0 = arith.constant 0 : i32
    %c0_i32_1 = arith.constant 0 : i32
    return %c0_i32, %c0_i32_0 : i32, i32
  }
  func.func @transform_6(%arg0: i32) -> (i32, i32, i32) {
    %c0_i32 = arith.constant 0 : i32
    %c0_i32_0 = arith.constant 0 : i32
    %c0_i32_1 = arith.constant 0 : i32
    return %arg0, %c0_i32, %c0_i32_0 : i32, i32, i32
  }
}

module attributes {stable_mosaic.version = 11 : i64} {
  func.func @_conv3d_elu_kernel(%arg0: i32, %arg1: memref<1x162x256xf32, #tpu.memory_space<vmem>>, %arg2: memref<64x162xf32, #tpu.memory_space<vmem>>, %arg3: memref<64x1xf32, #tpu.memory_space<vmem>>, %arg4: memref<1x64x256xf32, #tpu.memory_space<vmem>>) attributes {dimension_semantics = [#tpu.dimension_semantics<parallel>], iteration_bounds = array<i64: 2>, scalar_prefetch = 0 : i64, scratch_operands = 0 : i64, tpu.core_type = #tpu.core_type<tc>, window_params = [{transform_indices = @transform_0, window_bounds = array<i64: 1, 162, 256>}, {pipeline_mode = #tpu.pipeline_mode<synchronous>, transform_indices = @transform_1, window_bounds = array<i64: 64, 162>}, {pipeline_mode = #tpu.pipeline_mode<synchronous>, transform_indices = @transform_2, window_bounds = array<i64: 64, 1>}, {transform_indices = @transform_3, window_bounds = array<i64: 1, 64, 256>}]} {
    %c0 = arith.constant 0 : index
    %c0_0 = arith.constant 0 : index
    %0 = vector.load %arg2[%c0, %c0_0] : memref<64x162xf32, #tpu.memory_space<vmem>>, vector<64x162xf32>
    %c0_1 = arith.constant 0 : index
    %c0_2 = arith.constant 0 : index
    %c0_3 = arith.constant 0 : index
    %1 = vector.load %arg1[%c0_1, %c0_2, %c0_3] : memref<1x162x256xf32, #tpu.memory_space<vmem>>, vector<1x162x256xf32>
    %2 = vector.shape_cast %1 : vector<1x162x256xf32> to vector<162x256xf32>
    %cst = arith.constant dense<0.000000e+00> : vector<64x256xf32>
    %3 = tpu.matmul %0, %2, %cst {dimension_numbers = #tpu.dot_dimension_numbers<[1], [0], [0], [1], [0, 0, 1, 1], [], []>} : vector<64x162xf32>, vector<162x256xf32>, vector<64x256xf32> -> vector<64x256xf32>
    %c0_4 = arith.constant 0 : index
    %c0_5 = arith.constant 0 : index
    %4 = vector.load %arg3[%c0_4, %c0_5] : memref<64x1xf32, #tpu.memory_space<vmem>>, vector<64x1xf32>
    %5 = vector.broadcast %4 : vector<64x1xf32> to vector<64x256xf32>
    %6 = arith.addf %3, %5 : vector<64x256xf32>
    %cst_6 = arith.constant 0.000000e+00 : f32
    %7 = vector.broadcast %cst_6 : f32 to vector<64x256xf32>
    %8 = arith.cmpf ogt, %6, %7 : vector<64x256xf32>
    %cst_7 = arith.constant 0.000000e+00 : f32
    %9 = vector.broadcast %cst_7 : f32 to vector<64x256xf32>
    %10 = arith.minimumf %6, %9 : vector<64x256xf32>
    %11 = math.exp %10 : vector<64x256xf32>
    %cst_8 = arith.constant 1.000000e+00 : f32
    %12 = vector.broadcast %cst_8 : f32 to vector<64x256xf32>
    %13 = arith.subf %11, %12 : vector<64x256xf32>
    %14 = arith.select %8, %6, %13 : vector<64x256xi1>, vector<64x256xf32>
    %c0_9 = arith.constant 0 : index
    %c0_10 = arith.constant 0 : index
    %c0_11 = arith.constant 0 : index
    %15 = vector.load %arg4[%c0_9, %c0_10, %c0_11] : memref<1x64x256xf32, #tpu.memory_space<vmem>>, vector<1x64x256xf32>
    %16 = vector.shape_cast %15 : vector<1x64x256xf32> to vector<64x256xf32>
    %17 = vector.shape_cast %14 : vector<64x256xf32> to vector<1x64x256xf32>
    tpu.vector_store %arg4[%c0_9, %c0_10, %c0_11], %17 {strides = array<i32>} : memref<1x64x256xf32, #tpu.memory_space<vmem>>, vector<1x64x256xf32>,
    return
  }
  func.func @transform_0(%arg0: i32) -> (i32, i32, i32) {
    %c0_i32 = arith.constant 0 : i32
    %c0_i32_0 = arith.constant 0 : i32
    %c0_i32_1 = arith.constant 0 : i32
    return %arg0, %c0_i32, %c0_i32_0 : i32, i32, i32
  }
  func.func @transform_1(%arg0: i32) -> (i32, i32) {
    %c0_i32 = arith.constant 0 : i32
    %c0_i32_0 = arith.constant 0 : i32
    %c0_i32_1 = arith.constant 0 : i32
    return %c0_i32, %c0_i32_0 : i32, i32
  }
  func.func @transform_2(%arg0: i32) -> (i32, i32) {
    %c0_i32 = arith.constant 0 : i32
    %c0_i32_0 = arith.constant 0 : i32
    %c0_i32_1 = arith.constant 0 : i32
    return %c0_i32, %c0_i32_0 : i32, i32
  }
  func.func @transform_3(%arg0: i32) -> (i32, i32, i32) {
    %c0_i32 = arith.constant 0 : i32
    %c0_i32_0 = arith.constant 0 : i32
    %c0_i32_1 = arith.constant 0 : i32
    return %arg0, %c0_i32, %c0_i32_0 : i32, i32, i32
  }
}

</mosaic_0001>

<llo_original>
// kernel: unpack_block_forward.2
$region0: #{unpack_block_forward.2}
  #allocation0 [shape = 'u32[]', space=smem, size = 0x4, offset = 0x4, fixed_abs, tag = 'smem constant byte address 0x4 - core index']
  #allocation1 [shape = 'u32[144,128]{1,0:T(1,128)}', space=vmem, size = 0x12000, scoped, tag = 'internal scratch']
  %s0 = inlined_call_operand.vmem [shape: f32[2,36,256], index: 0, kind: input, shape index: {}]
  %s1 = inlined_call_operand.vmem [shape: f32[16,36], index: 1, kind: input, shape index: {}]
  %s2 = inlined_call_operand.vmem [shape: f32[16,1], index: 2, kind: input, shape index: {}]
  %s3 = inlined_call_operand.vmem [shape: f32[16,1], index: 3, kind: input, shape index: {}]
  %s4 = inlined_call_operand.vmem [shape: f32[16,1], index: 4, kind: input, shape index: {}]
  %s5 = inlined_call_operand.vmem [shape: f32[16,16], index: 5, kind: input, shape index: {}]
  %s6 = inlined_call_operand.vmem [shape: f32[2,16,256], index: 6, kind: output, shape index: {}]
  %s7 = sld [smem:[#allocation0]]
  $region57: #{unpack_block_forward.2} parent=0
    _
  %s9 = ssub.s32 1, %s7
  %s10 = scalar_select 0, %s9, %s7
  loop: start=0, step=1, limit=4
  $region2: #{unpack_block_forward.2} parent=0 // loop_pre_header
    _
  $region3: #{unpack_block_forward.2} parent=0 // loop_header
    %s12 = sphi 0, %s16
    %p13 = scmp.ge.s32.totalorder %s12, 4
    %s22 = sphi 0, %s24
    %s25 = sphi 0, %s22
    %s26 = sphi 0, %s25
    %s42 = sphi 0, %s26
    %s46 = sphi 0, %s46
    %s48 = sphi 0, %s46
    %s49 = sphi 0, %s48
    %s63 = sphi 0, %s49
    %s67 = sphi 0, %s67
    %s69 = sphi 0, %s67
    %s70 = sphi 0, %s69
    %s84 = sphi 0, %s70
    %s88 = sphi 0, %s88
    %s90 = sphi 0, %s88
    %s91 = sphi 0, %s90
    %s105 = sphi 0, %s91
    %s109 = sphi 0, %s109
    %s111 = sphi 0, %s109
    %s112 = sphi 0, %s111
    %s126 = sphi 0, %s112
    %s130 = sphi 0, %s130
    %s132 = sphi 0, %s130
    %s133 = sphi 0, %s132
    %s147 = sphi 0, %s133
    %s153 = sphi 0, %s155
    %s156 = sphi 0, %s153
    %s157 = sphi 0, %s156
    %s173 = sphi 0, %s157
  $region4: #{unpack_block_forward.2} parent=0 // loop_header_branch
    %15 = sbr.rel (%p13) target = $region8
  $region5: #{unpack_block_forward.2} parent=0 // loop_body
    %s17 = ssub.s32 %s12, 1
    %s18 = ssub.s32 %s12, 2
    %s19 = sadd.s32 %s12, 1
    %s20 = ssub.s32 %s12, %s19
    %p21 = scmp.eq.s32.totalorder %s20, 0
    %s23 = sadd.s32 %s22, 1
    %s24 = scalar_select %p21, %s22, %s23
    %p27 = pneg %p21
    %p28 = scmp.eq.s32.totalorder %s12, 1
    %p29 = por %p27, %p28
    %p30 = scmp.ne.s32.totalorder %s22, %s25
    %p31 = scmp.eq.s32.totalorder %s12, 0
    %p32 = por %p30, %p31
    %p33 = scmp.ne.s32.totalorder %s22, %s25
    %p34 = scmp.eq.s32.totalorder %s17, 1
    %p35 = por %p33, %p34
    %p36 = scmp.ne.s32.totalorder %s25, %s26
    %p37 = scmp.eq.s32.totalorder %s17, 0
    %p38 = por %p36, %p37
    %p39 = scmp.ne.s32.totalorder %s25, %s26
    %p40 = scmp.eq.s32.totalorder %s18, 1
    %p41 = por %p39, %p40
    %p43 = scmp.ne.s32.totalorder %s26, %s42
    %p44 = scmp.eq.s32.totalorder %s18, 0
    %p45 = por %p43, %p44
    %s47 = sadd.s32 %s46, 1
    %p50 = scmp.eq.s32.totalorder %s12, 1
    %p51 = scmp.ne.s32.totalorder %s46, %s48
    %p52 = scmp.eq.s32.totalorder %s12, 0
    %p53 = por %p51, %p52
    %p54 = scmp.ne.s32.totalorder %s46, %s48
    %p55 = scmp.eq.s32.totalorder %s17, 1
    %p56 = por %p54, %p55
    %p57 = scmp.ne.s32.totalorder %s48, %s49
    %p58 = scmp.eq.s32.totalorder %s17, 0
    %p59 = por %p57, %p58
    %p60 = scmp.ne.s32.totalorder %s48, %s49
    %p61 = scmp.eq.s32.totalorder %s18, 1
    %p62 = por %p60, %p61
    %p64 = scmp.ne.s32.totalorder %s49, %s63
    %p65 = scmp.eq.s32.totalorder %s18, 0
    %p66 = por %p64, %p65
    %s68 = sadd.s32 %s67, 1
    %p71 = scmp.eq.s32.totalorder %s12, 1
    %p72 = scmp.ne.s32.totalorder %s67, %s69
    %p73 = scmp.eq.s32.totalorder %s12, 0
    %p74 = por %p72, %p73
    %p75 = scmp.ne.s32.totalorder %s67, %s69
    %p76 = scmp.eq.s32.totalorder %s17, 1
    %p77 = por %p75, %p76
    %p78 = scmp.ne.s32.totalorder %s69, %s70
    %p79 = scmp.eq.s32.totalorder %s17, 0
    %p80 = por %p78, %p79
    %p81 = scmp.ne.s32.totalorder %s69, %s70
    %p82 = scmp.eq.s32.totalorder %s18, 1
    %p83 = por %p81, %p82
    %p85 = scmp.ne.s32.totalorder %s70, %s84
    %p86 = scmp.eq.s32.totalorder %s18, 0
    %p87 = por %p85, %p86
    %s89 = sadd.s32 %s88, 1
    %p92 = scmp.eq.s32.totalorder %s12, 1
    %p93 = scmp.ne.s32.totalorder %s88, %s90
    %p94 = scmp.eq.s32.totalorder %s12, 0
    %p95 = por %p93, %p94
    %p96 = scmp.ne.s32.totalorder %s88, %s90
    %p97 = scmp.eq.s32.totalorder %s17, 1
    %p98 = por %p96, %p97
    %p99 = scmp.ne.s32.totalorder %s90, %s91
    %p100 = scmp.eq.s32.totalorder %s17, 0
    %p101 = por %p99, %p100
    %p102 = scmp.ne.s32.totalorder %s90, %s91
    %p103 = scmp.eq.s32.totalorder %s18, 1
    %p104 = por %p102, %p103
    %p106 = scmp.ne.s32.totalorder %s91, %s105
    %p107 = scmp.eq.s32.totalorder %s18, 0
    %p108 = por %p106, %p107
    %s110 = sadd.s32 %s109, 1
    %p113 = scmp.eq.s32.totalorder %s12, 1
    %p114 = scmp.ne.s32.totalorder %s109, %s111
    %p115 = scmp.eq.s32.totalorder %s12, 0
    %p116 = por %p114, %p115
    %p117 = scmp.ne.s32.totalorder %s109, %s111
    %p118 = scmp.eq.s32.totalorder %s17, 1
    %p119 = por %p117, %p118
    %p120 = scmp.ne.s32.totalorder %s111, %s112
    %p121 = scmp.eq.s32.totalorder %s17, 0
    %p122 = por %p120, %p121
    %p123 = scmp.ne.s32.totalorder %s111, %s112
    %p124 = scmp.eq.s32.totalorder %s18, 1
    %p125 = por %p123, %p124
    %p127 = scmp.ne.s32.totalorder %s112, %s126
    %p128 = scmp.eq.s32.totalorder %s18, 0
    %p129 = por %p127, %p128
    %s131 = sadd.s32 %s130, 1
    %p134 = scmp.eq.s32.totalorder %s12, 1
    %p135 = scmp.ne.s32.totalorder %s130, %s132
    %p136 = scmp.eq.s32.totalorder %s12, 0
    %p137 = por %p135, %p136
    %p138 = scmp.ne.s32.totalorder %s130, %s132
    %p139 = scmp.eq.s32.totalorder %s17, 1
    %p140 = por %p138, %p139
    %p141 = scmp.ne.s32.totalorder %s132, %s133
    %p142 = scmp.eq.s32.totalorder %s17, 0
    %p143 = por %p141, %p142
    %p144 = scmp.ne.s32.totalorder %s132, %s133
    %p145 = scmp.eq.s32.totalorder %s18, 1
    %p146 = por %p144, %p145
    %p148 = scmp.ne.s32.totalorder %s133, %s147
    %p149 = scmp.eq.s32.totalorder %s18, 0
    %p150 = por %p148, %p149
    %s151 = ssub.s32 %s12, %s19
    %p152 = scmp.eq.s32.totalorder %s151, 0
    %s154 = sadd.s32 %s153, 1
    %s155 = scalar_select %p152, %s153, %s154
    %p158 = pneg %p152
    %p159 = scmp.eq.s32.totalorder %s12, 1
    %p160 = por %p158, %p159
    %p161 = scmp.ne.s32.totalorder %s153, %s156
    %p162 = scmp.eq.s32.totalorder %s12, 0
    %p163 = por %p161, %p162
    %p164 = scmp.ne.s32.totalorder %s153, %s156
    %p165 = scmp.eq.s32.totalorder %s17, 1
    %p166 = por %p164, %p165
    %p167 = scmp.ne.s32.totalorder %s156, %s157
    %p168 = scmp.eq.s32.totalorder %s17, 0
    %p169 = por %p167, %p168
    %p170 = scmp.ne.s32.totalorder %s156, %s157
    %p171 = scmp.eq.s32.totalorder %s18, 1
    %p172 = por %p170, %p171
    %p174 = scmp.ne.s32.totalorder %s157, %s173
    %p175 = scmp.eq.s32.totalorder %s18, 0
    %p176 = por %p174, %p175
    %p177 = scmp.le.s32.totalorder 1, %s12
    %p178 = scmp.lt.s32.totalorder %s12, 3
    %p179 = pnand %p177, %p178
    %p180 = pneg %p179
    // Predicated region
    $region9: #{unpack_block_forward.2} parent=5 // pred_check
      _
    $region10: #{unpack_block_forward.2} parent=5 // pred_check_branch
      %182 = sbr.rel (%p179) target = $region12
    $region11: #{unpack_block_forward.2} parent=5 // pred_region
      %s183 = ssub.s32 %s12, 1
      // Predicated region
      $region13: #{unpack_block_forward.2} parent=11 // pred_check
        %p184 = pneg %p59
      $region14: #{unpack_block_forward.2} parent=11 // pred_check_branch
        %186 = sbr.rel (%p184) target = $region16
      $region15: #{unpack_block_forward.2} parent=11 // pred_region
        _
      $region16: #{unpack_block_forward.2} parent=11 // pred_fallthru
        _
      // Predicated region
      $region17: #{unpack_block_forward.2} parent=11 // pred_check
        %p187 = pneg %p80
      $region18: #{unpack_block_forward.2} parent=11 // pred_check_branch
        %189 = sbr.rel (%p187) target = $region20
      $region19: #{unpack_block_forward.2} parent=11 // pred_region
        _
      $region20: #{unpack_block_forward.2} parent=11 // pred_fallthru
        _
      // Predicated region
      $region21: #{unpack_block_forward.2} parent=11 // pred_check
        %p190 = pneg %p101
      $region22: #{unpack_block_forward.2} parent=11 // pred_check_branch
        %192 = sbr.rel (%p190) target = $region24
      $region23: #{unpack_block_forward.2} parent=11 // pred_region
        _
      $region24: #{unpack_block_forward.2} parent=11 // pred_fallthru
        _
      // Predicated region
      $region25: #{unpack_block_forward.2} parent=11 // pred_check
        %p193 = pneg %p122
      $region26: #{unpack_block_forward.2} parent=11 // pred_check_branch
        %195 = sbr.rel (%p193) target = $region28
      $region27: #{unpack_block_forward.2} parent=11 // pred_region
        _
      $region28: #{unpack_block_forward.2} parent=11 // pred_fallthru
        _
      // Predicated region
      $region29: #{unpack_block_forward.2} parent=11 // pred_check
        %p196 = pneg %p143
      $region30: #{unpack_block_forward.2} parent=11 // pred_check_branch
        %198 = sbr.rel (%p196) target = $region32
      $region31: #{unpack_block_forward.2} parent=11 // pred_region
        _
      $region32: #{unpack_block_forward.2} parent=11 // pred_fallthru
        _
    $region12: #{unpack_block_forward.2} parent=5 // pred_fallthru
      _
    %p199 = scmp.lt.s32.totalorder %s12, 2
    // Predicated region
    $region33: #{unpack_block_forward.2} parent=5 // pred_check
      %p200 = pneg %p199
    $region34: #{unpack_block_forward.2} parent=5 // pred_check_branch
      %202 = sbr.rel (%p200) target = $region36
    $region35: #{unpack_block_forward.2} parent=5 // pred_region
      // Predicated region
      $region37: #{unpack_block_forward.2} parent=35 // pred_check
        %p203 = pneg %p32
      $region38: #{unpack_block_forward.2} parent=35 // pred_check_branch
        %205 = sbr.rel (%p203) target = $region40
      $region39: #{unpack_block_forward.2} parent=35 // pred_region
        %p206 = scmp.lt.s32.totalorder %s12, 1
        %s207 = scalar_select %p206, %s12, 1
        %s208 = smul.addr %s207, 10
        %s209 = smul.addr %s208, 8
        %s210 = scalar_lea.vmem %s0, %s209
      $region40: #{unpack_block_forward.2} parent=35 // pred_fallthru
        _
    $region36: #{unpack_block_forward.2} parent=5 // pred_fallthru
      _
    %p211 = scmp.le.s32.totalorder 1, %s12
    %p212 = scmp.lt.s32.totalorder %s12, 3
    %p213 = pnand %p211, %p212
    %p214 = pneg %p213
    // Predicated region
    $region41: #{unpack_block_forward.2} parent=5 // pred_check
      _
    $region42: #{unpack_block_forward.2} parent=5 // pred_check_branch
      %216 = sbr.rel (%p213) target = $region44
    $region43: #{unpack_block_forward.2} parent=5 // pred_region
      %s217 = ssub.s32 %s12, 1
      %p218 = scmp.lt.s32.totalorder %s17, 1
      %s219 = scalar_select %p218, %s17, 1
      %s220 = smul.addr %s219, 10
      %s221 = smul.addr %s220, 8
      %s222 = scalar_lea.vmem %s0, %s221
      %p223 = pneg %p38
      %p224 = pneg %p35
      %p225 = pneg %p59
      %p226 = pneg %p56
      %p227 = pneg %p80
      %p228 = pneg %p77
      %p229 = pneg %p101
      %p230 = pneg %p98
      %p231 = pneg %p122
      %p232 = pneg %p119
      %p233 = pneg %p143
      %p234 = pneg %p140
      %p235 = pneg %p169
      %p236 = pneg %p166
      %p237 = scmp.lt.s32.totalorder %s17, 1
      %s238 = scalar_select %p237, %s17, 1
      %s239 = smul.addr %s238, 4
      %s240 = smul.addr %s239, 8
      %s241 = scalar_lea.vmem %s6, %s240
      %p242 = scmp.lt.s32.totalorder %s17, 1
      %s243 = scalar_select %p242, %s17, 1
      %s244 = smul.addr %s243, 10
      %s245 = smul.addr %s244, 8
      %s246 = scalar_lea.vmem %s0, %s245
      %p247 = scmp.lt.s32.totalorder %s17, 1
      %s248 = scalar_select %p247, %s17, 1
      %s249 = smul.addr %s248, 4
      %s250 = smul.addr %s249, 8
      %s251 = scalar_lea.vmem %s6, %s250
      %v252 = vld [vmem:[%s1] sm:$0xff]
      %v253 = vld [vmem:[%s1 + $0x8] sm:$0xff]
      %v254 = vld [vmem:[%s246] sm:$0xff]
      %v255 = vld [vmem:[%s246 + $0x8] sm:$0xff]
      %v256 = vld [vmem:[%s246 + $0x10] sm:$0xff]
      %v257 = vld [vmem:[%s246 + $0x18] sm:$0xff]
      %v258 = vld [vmem:[%s246 + $0x20] sm:$0xff]
      %v259 = vld [vmem:[%s246 + $0x28] sm:$0xff]
      %v260 = vld [vmem:[%s246 + $0x30] sm:$0xff]
      %v261 = vld [vmem:[%s246 + $0x38] sm:$0xff]
      %v262 = vld [vmem:[%s246 + $0x40] sm:$0xf]
      %v263 = vld [vmem:[%s246 + $0x48] sm:$0xf]
      %v264 = vld [vmem:[%s2] sm:$0xff]
      %v265 = vld [vmem:[%s2 + $0x8] sm:$0xff]
      %267 = vset.pattern.permute.xlu0 0
      %268 = vperm.xlu0 %267, %v264
      %v269 = vpop.permute.xlu0 %268
      %272 = vset.pattern.permute.xlu0 0
      %273 = vperm.xlu0 %272, %v265
      %v274 = vpop.permute.xlu0 %273
      %vm276 = vcmask 293888
      %v278 = vsel %vm276, %v252, 0
      %v281 = vsel %vm276, %v253, 0
      %vm283 = vcmask 1043456
      %v285 = vsel %vm283, %v262, 0
      %v288 = vsel %vm283, %v263, 0
      %290 = vmatprep.subr.mxu0 0.0
      %291 = vmatpush1.msra.mxu0 0.0
      %292 = vmatprep.subr.mxu0 0.0
      %293 = vmatpush1.msra.mxu0 0.0
      %294 = vmatprep.subr.mxu0 0.0
      %295 = vmatpush1.msra.mxu0 0.0
      %296 = vmatprep.subr.mxu0 0.0
      %297 = vmatpush1.msra.mxu0 0.0
      %298 = vmatprep.subr.mxu0 0.0
      %299 = vmatpush1.msra.mxu0 0.0
      %300 = vmatprep.subr.mxu0 0.0
      %301 = vmatpush1.msra.mxu0 0.0
      %302 = vmatprep.subr.mxu0 0.0
      %303 = vmatpush1.msra.mxu0 0.0
      %304 = vmatprep.subr.mxu0 0.0
      %305 = vmatpush1.msra.mxu0 0.0
      %306 = vmatprep.subr.mxu0 0.0
      %307 = vmatpush1.msra.mxu0 0.0
      %308 = vmatprep.subr.mxu0 0.0
      %309 = vmatpush1.msra.mxu0 0.0
      %310 = vmatprep.subr.mxu0 0.0
      %311 = vmatpush1.msra.mxu0 0.0
      %312 = vmatprep.subr.mxu0 %v288
      %313 = vmatpush1.msra.mxu0 %v285
      %314 = vmatprep.subr.mxu0 %v261
      %315 = vmatpush1.msra.mxu0 %v260
      %316 = vmatprep.subr.mxu0 %v259
      %317 = vmatpush1.msra.mxu0 %v258
      %318 = vmatprep.subr.mxu0 %v257
      %319 = vmatpush1.msra.mxu0 %v256
      %320 = vmatprep.subr.mxu0 %v255
      %321 = vmatpush1.msra.mxu0 %v254
      %322 = vmatprep.subr.mxu0 0.0
      %323 = vmatpush2.msra.mxu0 0.0
      %324 = vmatprep.subr.mxu0 0.0
      %325 = vmatpush2.msra.mxu0 0.0
      %326 = vmatprep.subr.mxu0 0.0
      %327 = vmatpush2.msra.mxu0 0.0
      %328 = vmatprep.subr.mxu0 0.0
      %329 = vmatpush2.msra.mxu0 0.0
      %330 = vmatprep.subr.mxu0 0.0
      %331 = vmatpush2.msra.mxu0 0.0
      %332 = vmatprep.subr.mxu0 0.0
      %333 = vmatpush2.msra.mxu0 0.0
      %334 = vmatprep.subr.mxu0 0.0
      %335 = vmatpush2.msra.mxu0 0.0
      %336 = vmatprep.subr.mxu0 0.0
      %337 = vmatpush2.msra.mxu0 0.0
      %338 = vmatprep.subr.mxu0 0.0
      %339 = vmatpush2.msra.mxu0 0.0
      %340 = vmatprep.subr.mxu0 0.0
      %341 = vmatpush2.msra.mxu0 0.0
      %342 = vmatprep.subr.mxu0 0.0
      %343 = vmatpush2.msra.mxu0 0.0
      %344 = vmatprep.subr.mxu0 0.0
      %345 = vmatpush2.msra.mxu0 0.0
      %346 = vmatprep.subr.mxu0 0.0
      %347 = vmatpush2.msra.mxu0 0.0
      %348 = vmatprep.subr.mxu0 0.0
      %349 = vmatpush2.msra.mxu0 0.0
      %350 = vmatprep.subr.mxu0 0.0
      %351 = vmatpush2.msra.mxu0 0.0
      %352 = vmatprep.subr.mxu0 0.0
      %353 = vmatpush2.msra.mxu0 0.0
      %354 = vmatprep.mubr.f32.mxu0 0.0
      %355 = vmatmul.mubr.f32.gmra.mxu0 %v278
      %v356 = vpop.f32.mrf.mxu0
      %v357 = vadd.f32 %v269, %v356
      %v358 = vpop.f32.mrf.mxu0
      %v359 = vadd.f32 %v269, %v358
      %360 = vmatprep.mubr.f32.mxu0 0.0
      %361 = vmatmul.mubr.f32.gmra.mxu0 %v281
      %v362 = vpop.f32.mrf.mxu0
      %v363 = vadd.f32 %v274, %v362
      %v364 = vpop.f32.mrf.mxu0
      %v365 = vadd.f32 %v274, %v364
      %366 = vdwg.mxu0
      %v367 = vadd.f32 %v357, %v359
      %368 = vadd.xlane.f32.xlu0 %v367
      %v369 = vpop.xlane.xlu0 %368
      %v370 = vadd.f32 %v363, %v365
      %371 = vadd.xlane.f32.xlu0 %v370
      %v372 = vpop.xlane.xlu0 %371
      %v373 = vmul.f32 %v369, 0.00390625
      %v374 = vmul.f32 %v372, 0.00390625
      %v375 = vsub.f32 %v357, %v373
      %v376 = vsub.f32 %v359, %v373
      %v377 = vsub.f32 %v363, %v374
      %v378 = vsub.f32 %v365, %v374
      %v379 = vmul.f32 %v375, %v375
      %v380 = vmul.f32 %v376, %v376
      %v381 = vmul.f32 %v377, %v377
      %v382 = vmul.f32 %v378, %v378
      %v383 = vadd.f32 %v379, %v380
      %384 = vadd.xlane.f32.xlu0 %v383
      %v385 = vpop.xlane.xlu0 %384
      %v386 = vadd.f32 %v381, %v382
      %387 = vadd.xlane.f32.xlu0 %v386
      %v388 = vpop.xlane.xlu0 %387
      %v389 = vmul.f32 %v385, 0.00390625
      %v390 = vmul.f32 %v388, 0.00390625
      %v391 = vadd.f32 %v389, 1e-10
      %v392 = vadd.f32 %v390, 1e-10
      %v393 = vrsqrt.pop %v391
      %v394 = vrsqrt.pop %v392
      %v395 = vld [vmem:[%s3] sm:$0xff]
      %v396 = vld [vmem:[%s3 + $0x8] sm:$0xff]
      %v397 = vmul.f32 %v393, %v395
      %v398 = vmul.f32 %v394, %v396
      %400 = vset.pattern.permute.xlu0 0
      %401 = vperm.xlu0 %400, %v397
      %v402 = vpop.permute.xlu0 %401
      %405 = vset.pattern.permute.xlu0 0
      %406 = vperm.xlu0 %405, %v398
      %v407 = vpop.permute.xlu0 %406
      %v409 = vmul.f32 %v375, %v402
      %v410 = vmul.f32 %v376, %v402
      %v411 = vmul.f32 %v377, %v407
      %v412 = vmul.f32 %v378, %v407
      %v413 = vld [vmem:[%s4] sm:$0xff]
      %v414 = vld [vmem:[%s4 + $0x8] sm:$0xff]
      %416 = vset.pattern.permute.xlu0 0
      %417 = vperm.xlu0 %416, %v413
      %v418 = vpop.permute.xlu0 %417
      %421 = vset.pattern.permute.xlu0 0
      %422 = vperm.xlu0 %421, %v414
      %v423 = vpop.permute.xlu0 %422
      %v425 = vadd.f32 %v409, %v418
      %v426 = vadd.f32 %v410, %v418
      %v427 = vadd.f32 %v411, %v423
      %v428 = vadd.f32 %v412, %v423
      %vm429 = vcmp.gt.f32.partialorder %v425, 0.0
      %vm430 = vcmp.gt.f32.partialorder %v426, 0.0
      %vm431 = vcmp.gt.f32.partialorder %v427, 0.0
      %vm432 = vcmp.gt.f32.partialorder %v428, 0.0
      %v433 = vmin.f32 %v425, 0.0
      %v434 = vmin.f32 %v426, 0.0
      %v435 = vmin.f32 %v427, 0.0
      %v436 = vmin.f32 %v428, 0.0
      %v437 = vmul.f32 %v433, 1.442695
      %v438 = vpow.pop %v437
      %v439 = vmul.f32 %v434, 1.442695
      %v440 = vpow.pop %v439
      %v441 = vmul.f32 %v435, 1.442695
      %v442 = vpow.pop %v441
      %v443 = vmul.f32 %v436, 1.442695
      %v444 = vpow.pop %v443
      %v445 = vsub.f32 %v438, 1.0
      %v446 = vsub.f32 %v440, 1.0
      %v447 = vsub.f32 %v442, 1.0
      %v448 = vsub.f32 %v444, 1.0
      %v449 = vsel %vm429, %v425, %v445
      %v450 = vsel %vm430, %v426, %v446
      %v451 = vsel %vm431, %v427, %v447
      %v452 = vsel %vm432, %v428, %v448
      %453 = vst [vmem:[%s251] sm:$0xff] %v449
      %454 = vst [vmem:[%s251 + $0x8] sm:$0xff] %v450
      %455 = vst [vmem:[%s251 + $0x10] sm:$0xff] %v451
      %456 = vst [vmem:[%s251 + $0x18] sm:$0xff] %v452
      %p457 = scmp.lt.s32.totalorder %s17, 1
      %s458 = scalar_select %p457, %s17, 1
      %s459 = smul.addr %s458, 4
      %s460 = smul.addr %s459, 8
      %s461 = scalar_lea.vmem %s6, %s460
      // Predicated region
      $region45: #{unpack_block_forward.2} parent=43 // pred_check
        %p462 = pneg %p166
      $region46: #{unpack_block_forward.2} parent=43 // pred_check_branch
        %464 = sbr.rel (%p462) target = $region48
      $region47: #{unpack_block_forward.2} parent=43 // pred_region
        _
      $region48: #{unpack_block_forward.2} parent=43 // pred_fallthru
        _
    $region44: #{unpack_block_forward.2} parent=5 // pred_fallthru
      _
    %p465 = scmp.le.s32.totalorder 2, %s12
    // Predicated region
    $region49: #{unpack_block_forward.2} parent=5 // pred_check
      %p466 = pneg %p465
    $region50: #{unpack_block_forward.2} parent=5 // pred_check_branch
      %468 = sbr.rel (%p466) target = $region52
    $region51: #{unpack_block_forward.2} parent=5 // pred_region
      %s469 = ssub.s32 %s12, 2
      // Predicated region
      $region53: #{unpack_block_forward.2} parent=51 // pred_check
        %p470 = pneg %p172
      $region54: #{unpack_block_forward.2} parent=51 // pred_check_branch
        %472 = sbr.rel (%p470) target = $region56
      $region55: #{unpack_block_forward.2} parent=51 // pred_region
        %p473 = scmp.lt.s32.totalorder %s18, 1
        %s474 = scalar_select %p473, %s18, 1
        %s475 = smul.addr %s474, 4
        %s476 = smul.addr %s475, 8
        %s477 = scalar_lea.vmem %s6, %s476
      $region56: #{unpack_block_forward.2} parent=51 // pred_fallthru
        _
    $region52: #{unpack_block_forward.2} parent=5 // pred_fallthru
      _
  $region6: #{unpack_block_forward.2} parent=0 // loop_footer
    %s16 = sadd.s32 1, %s12
  $region7: #{unpack_block_forward.2} parent=0 // loop_footer_branch
    %11 = sbr.rel target = $region3
  $region8: #{unpack_block_forward.2} parent=0 // loop_exit
    _

// kernel: unpack_block_forward.3
$region0: #{unpack_block_forward.3}
  #allocation0 [shape = 'u32[]', space=smem, size = 0x4, offset = 0x4, fixed_abs, tag = 'smem constant byte address 0x4 - core index']
  #allocation1 [shape = 'u32[144,128]{1,0:T(1,128)}', space=vmem, size = 0x12000, scoped, tag = 'internal scratch']
  %s0 = inlined_call_operand.vmem [shape: f32[2,162,256], index: 0, kind: input, shape index: {}]
  %s1 = inlined_call_operand.vmem [shape: f32[64,162], index: 1, kind: input, shape index: {}]
  %s2 = inlined_call_operand.vmem [shape: f32[64,1], index: 2, kind: input, shape index: {}]
  %s3 = inlined_call_operand.vmem [shape: f32[2,64,256], index: 3, kind: output, shape index: {}]
  %s4 = sld [smem:[#allocation0]]
  $region45: #{unpack_block_forward.3} parent=0
    _
  %s6 = ssub.s32 1, %s4
  %s7 = scalar_select 0, %s6, %s4
  loop: start=0, step=1, limit=4
  $region2: #{unpack_block_forward.3} parent=0 // loop_pre_header
    _
  $region3: #{unpack_block_forward.3} parent=0 // loop_header
    %s9 = sphi 0, %s13
    %p10 = scmp.ge.s32.totalorder %s9, 4
    %s19 = sphi 0, %s21
    %s22 = sphi 0, %s19
    %s23 = sphi 0, %s22
    %s39 = sphi 0, %s23
    %s43 = sphi 0, %s43
    %s45 = sphi 0, %s43
    %s46 = sphi 0, %s45
    %s60 = sphi 0, %s46
    %s64 = sphi 0, %s64
    %s66 = sphi 0, %s64
    %s67 = sphi 0, %s66
    %s81 = sphi 0, %s67
    %s87 = sphi 0, %s89
    %s90 = sphi 0, %s87
    %s91 = sphi 0, %s90
    %s107 = sphi 0, %s91
  $region4: #{unpack_block_forward.3} parent=0 // loop_header_branch
    %12 = sbr.rel (%p10) target = $region8
  $region5: #{unpack_block_forward.3} parent=0 // loop_body
    %s14 = ssub.s32 %s9, 1
    %s15 = ssub.s32 %s9, 2
    %s16 = sadd.s32 %s9, 1
    %s17 = ssub.s32 %s9, %s16
    %p18 = scmp.eq.s32.totalorder %s17, 0
    %s20 = sadd.s32 %s19, 1
    %s21 = scalar_select %p18, %s19, %s20
    %p24 = pneg %p18
    %p25 = scmp.eq.s32.totalorder %s9, 1
    %p26 = por %p24, %p25
    %p27 = scmp.ne.s32.totalorder %s19, %s22
    %p28 = scmp.eq.s32.totalorder %s9, 0
    %p29 = por %p27, %p28
    %p30 = scmp.ne.s32.totalorder %s19, %s22
    %p31 = scmp.eq.s32.totalorder %s14, 1
    %p32 = por %p30, %p31
    %p33 = scmp.ne.s32.totalorder %s22, %s23
    %p34 = scmp.eq.s32.totalorder %s14, 0
    %p35 = por %p33, %p34
    %p36 = scmp.ne.s32.totalorder %s22, %s23
    %p37 = scmp.eq.s32.totalorder %s15, 1
    %p38 = por %p36, %p37
    %p40 = scmp.ne.s32.totalorder %s23, %s39
    %p41 = scmp.eq.s32.totalorder %s15, 0
    %p42 = por %p40, %p41
    %s44 = sadd.s32 %s43, 1
    %p47 = scmp.eq.s32.totalorder %s9, 1
    %p48 = scmp.ne.s32.totalorder %s43, %s45
    %p49 = scmp.eq.s32.totalorder %s9, 0
    %p50 = por %p48, %p49
    %p51 = scmp.ne.s32.totalorder %s43, %s45
    %p52 = scmp.eq.s32.totalorder %s14, 1
    %p53 = por %p51, %p52
    %p54 = scmp.ne.s32.totalorder %s45, %s46
    %p55 = scmp.eq.s32.totalorder %s14, 0
    %p56 = por %p54, %p55
    %p57 = scmp.ne.s32.totalorder %s45, %s46
    %p58 = scmp.eq.s32.totalorder %s15, 1
    %p59 = por %p57, %p58
    %p61 = scmp.ne.s32.totalorder %s46, %s60
    %p62 = scmp.eq.s32.totalorder %s15, 0
    %p63 = por %p61, %p62
    %s65 = sadd.s32 %s64, 1
    %p68 = scmp.eq.s32.totalorder %s9, 1
    %p69 = scmp.ne.s32.totalorder %s64, %s66
    %p70 = scmp.eq.s32.totalorder %s9, 0
    %p71 = por %p69, %p70
    %p72 = scmp.ne.s32.totalorder %s64, %s66
    %p73 = scmp.eq.s32.totalorder %s14, 1
    %p74 = por %p72, %p73
    %p75 = scmp.ne.s32.totalorder %s66, %s67
    %p76 = scmp.eq.s32.totalorder %s14, 0
    %p77 = por %p75, %p76
    %p78 = scmp.ne.s32.totalorder %s66, %s67
    %p79 = scmp.eq.s32.totalorder %s15, 1
    %p80 = por %p78, %p79
    %p82 = scmp.ne.s32.totalorder %s67, %s81
    %p83 = scmp.eq.s32.totalorder %s15, 0
    %p84 = por %p82, %p83
    %s85 = ssub.s32 %s9, %s16
    %p86 = scmp.eq.s32.totalorder %s85, 0
    %s88 = sadd.s32 %s87, 1
    %s89 = scalar_select %p86, %s87, %s88
    %p92 = pneg %p86
    %p93 = scmp.eq.s32.totalorder %s9, 1
    %p94 = por %p92, %p93
    %p95 = scmp.ne.s32.totalorder %s87, %s90
    %p96 = scmp.eq.s32.totalorder %s9, 0
    %p97 = por %p95, %p96
    %p98 = scmp.ne.s32.totalorder %s87, %s90
    %p99 = scmp.eq.s32.totalorder %s14, 1
    %p100 = por %p98, %p99
    %p101 = scmp.ne.s32.totalorder %s90, %s91
    %p102 = scmp.eq.s32.totalorder %s14, 0
    %p103 = por %p101, %p102
    %p104 = scmp.ne.s32.totalorder %s90, %s91
    %p105 = scmp.eq.s32.totalorder %s15, 1
    %p106 = por %p104, %p105
    %p108 = scmp.ne.s32.totalorder %s91, %s107
    %p109 = scmp.eq.s32.totalorder %s15, 0
    %p110 = por %p108, %p109
    %p111 = scmp.le.s32.totalorder 1, %s9
    %p112 = scmp.lt.s32.totalorder %s9, 3
    %p113 = pnand %p111, %p112
    %p114 = pneg %p113
    // Predicated region
    $region9: #{unpack_block_forward.3} parent=5 // pred_check
      _
    $region10: #{unpack_block_forward.3} parent=5 // pred_check_branch
      %116 = sbr.rel (%p113) target = $region12
    $region11: #{unpack_block_forward.3} parent=5 // pred_region
      %s117 = ssub.s32 %s9, 1
      // Predicated region
      $region13: #{unpack_block_forward.3} parent=11 // pred_check
        %p118 = pneg %p56
      $region14: #{unpack_block_forward.3} parent=11 // pred_check_branch
        %120 = sbr.rel (%p118) target = $region16
      $region15: #{unpack_block_forward.3} parent=11 // pred_region
        _
      $region16: #{unpack_block_forward.3} parent=11 // pred_fallthru
        _
      // Predicated region
      $region17: #{unpack_block_forward.3} parent=11 // pred_check
        %p121 = pneg %p77
      $region18: #{unpack_block_forward.3} parent=11 // pred_check_branch
        %123 = sbr.rel (%p121) target = $region20
      $region19: #{unpack_block_forward.3} parent=11 // pred_region
        _
      $region20: #{unpack_block_forward.3} parent=11 // pred_fallthru
        _
    $region12: #{unpack_block_forward.3} parent=5 // pred_fallthru
      _
    %p124 = scmp.lt.s32.totalorder %s9, 2
    // Predicated region
    $region21: #{unpack_block_forward.3} parent=5 // pred_check
      %p125 = pneg %p124
    $region22: #{unpack_block_forward.3} parent=5 // pred_check_branch
      %127 = sbr.rel (%p125) target = $region24
    $region23: #{unpack_block_forward.3} parent=5 // pred_region
      // Predicated region
      $region25: #{unpack_block_forward.3} parent=23 // pred_check
        %p128 = pneg %p29
      $region26: #{unpack_block_forward.3} parent=23 // pred_check_branch
        %130 = sbr.rel (%p128) target = $region28
      $region27: #{unpack_block_forward.3} parent=23 // pred_region
        %p131 = scmp.lt.s32.totalorder %s9, 1
        %s132 = scalar_select %p131, %s9, 1
        %s133 = smul.addr %s132, 42
        %s134 = smul.addr %s133, 8
        %s135 = scalar_lea.vmem %s0, %s134
      $region28: #{unpack_block_forward.3} parent=23 // pred_fallthru
        _
    $region24: #{unpack_block_forward.3} parent=5 // pred_fallthru
      _
    %p136 = scmp.le.s32.totalorder 1, %s9
    %p137 = scmp.lt.s32.totalorder %s9, 3
    %p138 = pnand %p136, %p137
    %p139 = pneg %p138
    // Predicated region
    $region29: #{unpack_block_forward.3} parent=5 // pred_check
      _
    $region30: #{unpack_block_forward.3} parent=5 // pred_check_branch
      %141 = sbr.rel (%p138) target = $region32
    $region31: #{unpack_block_forward.3} parent=5 // pred_region
      %s142 = ssub.s32 %s9, 1
      %p143 = scmp.lt.s32.totalorder %s14, 1
      %s144 = scalar_select %p143, %s14, 1
      %s145 = smul.addr %s144, 42
      %s146 = smul.addr %s145, 8
      %s147 = scalar_lea.vmem %s0, %s146
      %p148 = pneg %p35
      %p149 = pneg %p32
      %p150 = pneg %p56
      %p151 = pneg %p53
      %p152 = pneg %p77
      %p153 = pneg %p74
      %p154 = pneg %p103
      %p155 = pneg %p100
      %p156 = scmp.lt.s32.totalorder %s14, 1
      %s157 = scalar_select %p156, %s14, 1
      %s158 = smul.addr %s157, 16
      %s159 = smul.addr %s158, 8
      %s160 = scalar_lea.vmem %s3, %s159
      %p161 = scmp.lt.s32.totalorder %s14, 1
      %s162 = scalar_select %p161, %s14, 1
      %s163 = smul.addr %s162, 42
      %s164 = smul.addr %s163, 8
      %s165 = scalar_lea.vmem %s0, %s164
      %p166 = scmp.lt.s32.totalorder %s14, 1
      %s167 = scalar_select %p166, %s14, 1
      %s168 = smul.addr %s167, 16
      %s169 = smul.addr %s168, 8
      %s170 = scalar_lea.vmem %s3, %s169
      %v171 = vld [vmem:[%s1] sm:$0xff]
      %v172 = vld [vmem:[%s1 + $0x8] sm:$0xff]
      %v173 = vld [vmem:[%s1 + $0x10] sm:$0xff]
      %v174 = vld [vmem:[%s1 + $0x18] sm:$0xff]
      %v175 = vld [vmem:[%s1 + $0x20] sm:$0xff]
      %v176 = vld [vmem:[%s1 + $0x28] sm:$0xff]
      %v177 = vld [vmem:[%s1 + $0x30] sm:$0xff]
      %v178 = vld [vmem:[%s1 + $0x38] sm:$0xff]
      %v179 = vld [vmem:[%s1 + $0x40] sm:$0xff]
      %v180 = vld [vmem:[%s1 + $0x48] sm:$0xff]
      %v181 = vld [vmem:[%s1 + $0x50] sm:$0xff]
      %v182 = vld [vmem:[%s1 + $0x58] sm:$0xff]
      %v183 = vld [vmem:[%s1 + $0x60] sm:$0xff]
      %v184 = vld [vmem:[%s1 + $0x68] sm:$0xff]
      %v185 = vld [vmem:[%s1 + $0x70] sm:$0xff]
      %v186 = vld [vmem:[%s1 + $0x78] sm:$0xff]
      %v187 = vld [vmem:[%s165] sm:$0xff]
      %v188 = vld [vmem:[%s165 + $0x8] sm:$0xff]
      %v189 = vld [vmem:[%s165 + $0x10] sm:$0xff]
      %v190 = vld [vmem:[%s165 + $0x18] sm:$0xff]
      %v191 = vld [vmem:[%s165 + $0x20] sm:$0xff]
      %v192 = vld [vmem:[%s165 + $0x28] sm:$0xff]
      %v193 = vld [vmem:[%s165 + $0x30] sm:$0xff]
      %v194 = vld [vmem:[%s165 + $0x38] sm:$0xff]
      %v195 = vld [vmem:[%s165 + $0x40] sm:$0xff]
      %v196 = vld [vmem:[%s165 + $0x48] sm:$0xff]
      %v197 = vld [vmem:[%s165 + $0x50] sm:$0xff]
      %v198 = vld [vmem:[%s165 + $0x58] sm:$0xff]
      %v199 = vld [vmem:[%s165 + $0x60] sm:$0xff]
      %v200 = vld [vmem:[%s165 + $0x68] sm:$0xff]
      %v201 = vld [vmem:[%s165 + $0x70] sm:$0xff]
      %v202 = vld [vmem:[%s165 + $0x78] sm:$0xff]
      %v203 = vld [vmem:[%s165 + $0x80] sm:$0xff]
      %v204 = vld [vmem:[%s165 + $0x88] sm:$0xff]
      %v205 = vld [vmem:[%s165 + $0x90] sm:$0xff]
      %v206 = vld [vmem:[%s165 + $0x98] sm:$0xff]
      %v207 = vld [vmem:[%s165 + $0xa0] sm:$0xff]
      %v208 = vld [vmem:[%s165 + $0xa8] sm:$0xff]
      %v209 = vld [vmem:[%s165 + $0xb0] sm:$0xff]
      %v210 = vld [vmem:[%s165 + $0xb8] sm:$0xff]
      %v211 = vld [vmem:[%s165 + $0xc0] sm:$0xff]
      %v212 = vld [vmem:[%s165 + $0xc8] sm:$0xff]
      %v213 = vld [vmem:[%s165 + $0xd0] sm:$0xff]
      %v214 = vld [vmem:[%s165 + $0xd8] sm:$0xff]
      %v215 = vld [vmem:[%s165 + $0xe0] sm:$0xff]
      %v216 = vld [vmem:[%s165 + $0xe8] sm:$0xff]
      %v217 = vld [vmem:[%s165 + $0xf0] sm:$0xff]
      %v218 = vld [vmem:[%s165 + $0xf8] sm:$0xff]
      %v219 = vld [vmem:[%s165 + $0x100] sm:$0xff]
      %v220 = vld [vmem:[%s165 + $0x108] sm:$0xff]
      %v221 = vld [vmem:[%s165 + $0x110] sm:$0xff]
      %v222 = vld [vmem:[%s165 + $0x118] sm:$0xff]
      %v223 = vld [vmem:[%s165 + $0x120] sm:$0xff]
      %v224 = vld [vmem:[%s165 + $0x128] sm:$0xff]
      %v225 = vld [vmem:[%s165 + $0x130] sm:$0xff]
      %v226 = vld [vmem:[%s165 + $0x138] sm:$0xff]
      %v227 = vld [vmem:[%s165 + $0x140] sm:$0x3]
      %v228 = vld [vmem:[%s165 + $0x148] sm:$0x3]
      %v229 = vld [vmem:[%s2] sm:$0xff]
      %v230 = vld [vmem:[%s2 + $0x8] sm:$0xff]
      %v231 = vld [vmem:[%s2 + $0x10] sm:$0xff]
      %v232 = vld [vmem:[%s2 + $0x18] sm:$0xff]
      %v233 = vld [vmem:[%s2 + $0x20] sm:$0xff]
      %v234 = vld [vmem:[%s2 + $0x28] sm:$0xff]
      %v235 = vld [vmem:[%s2 + $0x30] sm:$0xff]
      %v236 = vld [vmem:[%s2 + $0x38] sm:$0xff]
      %238 = vset.pattern.permute.xlu0 0
      %239 = vperm.xlu0 %238, %v229
      %v240 = vpop.permute.xlu0 %239
      %243 = vset.pattern.permute.xlu0 0
      %244 = vperm.xlu0 %243, %v230
      %v245 = vpop.permute.xlu0 %244
      %248 = vset.pattern.permute.xlu0 0
      %249 = vperm.xlu0 %248, %v231
      %v250 = vpop.permute.xlu0 %249
      %253 = vset.pattern.permute.xlu0 0
      %254 = vperm.xlu0 %253, %v232
      %v255 = vpop.permute.xlu0 %254
      %258 = vset.pattern.permute.xlu0 0
      %259 = vperm.xlu0 %258, %v233
      %v260 = vpop.permute.xlu0 %259
      %263 = vset.pattern.permute.xlu0 0
      %264 = vperm.xlu0 %263, %v234
      %v265 = vpop.permute.xlu0 %264
      %268 = vset.pattern.permute.xlu0 0
      %269 = vperm.xlu0 %268, %v235
      %v270 = vpop.permute.xlu0 %269
      %273 = vset.pattern.permute.xlu0 0
      %274 = vperm.xlu0 %273, %v236
      %v275 = vpop.permute.xlu0 %274
      %vm277 = vcmask 277504
      %v279 = vsel %vm277, %v172, 0
      %v282 = vsel %vm277, %v174, 0
      %v285 = vsel %vm277, %v176, 0
      %v288 = vsel %vm277, %v178, 0
      %v291 = vsel %vm277, %v180, 0
      %v294 = vsel %vm277, %v182, 0
      %v297 = vsel %vm277, %v184, 0
      %v300 = vsel %vm277, %v186, 0
      %vm302 = vcmask 1041408
      %v304 = vsel %vm302, %v227, 0
      %v307 = vsel %vm302, %v228, 0
      %309 = vmatprep.subr.mxu0 %v218
      %310 = vmatpush1.msra.mxu0 %v217
      %311 = vmatprep.subr.mxu0 %v216
      %312 = vmatpush1.msra.mxu0 %v215
      %313 = vmatprep.subr.mxu0 %v214
      %314 = vmatpush1.msra.mxu0 %v213
      %315 = vmatprep.subr.mxu0 %v212
      %316 = vmatpush1.msra.mxu0 %v211
      %317 = vmatprep.subr.mxu0 %v210
      %318 = vmatpush1.msra.mxu0 %v209
      %319 = vmatprep.subr.mxu0 %v208
      %320 = vmatpush1.msra.mxu0 %v207
      %321 = vmatprep.subr.mxu0 %v206
      %322 = vmatpush1.msra.mxu0 %v205
      %323 = vmatprep.subr.mxu0 %v204
      %324 = vmatpush1.msra.mxu0 %v203
      %325 = vmatprep.subr.mxu0 %v202
      %326 = vmatpush1.msra.mxu0 %v201
      %327 = vmatprep.subr.mxu0 %v200
      %328 = vmatpush1.msra.mxu0 %v199
      %329 = vmatprep.subr.mxu0 %v198
      %330 = vmatpush1.msra.mxu0 %v197
      %331 = vmatprep.subr.mxu0 %v196
      %332 = vmatpush1.msra.mxu0 %v195
      %333 = vmatprep.subr.mxu0 %v194
      %334 = vmatpush1.msra.mxu0 %v193
      %335 = vmatprep.subr.mxu0 %v192
      %336 = vmatpush1.msra.mxu0 %v191
      %337 = vmatprep.subr.mxu0 %v190
      %338 = vmatpush1.msra.mxu0 %v189
      %339 = vmatprep.subr.mxu0 %v188
      %340 = vmatpush1.msra.mxu0 %v187
      %341 = vmatprep.subr.mxu0 0.0
      %342 = vmatpush2.msra.mxu0 0.0
      %343 = vmatprep.subr.mxu0 0.0
      %344 = vmatpush2.msra.mxu0 0.0
      %345 = vmatprep.subr.mxu0 0.0
      %346 = vmatpush2.msra.mxu0 0.0
      %347 = vmatprep.subr.mxu0 0.0
      %348 = vmatpush2.msra.mxu0 0.0
      %349 = vmatprep.subr.mxu0 0.0
      %350 = vmatpush2.msra.mxu0 0.0
      %351 = vmatprep.subr.mxu0 0.0
      %352 = vmatpush2.msra.mxu0 0.0
      %353 = vmatprep.subr.mxu0 0.0
      %354 = vmatpush2.msra.mxu0 0.0
      %355 = vmatprep.subr.mxu0 0.0
      %356 = vmatpush2.msra.mxu0 0.0
      %357 = vmatprep.subr.mxu0 0.0
      %358 = vmatpush2.msra.mxu0 0.0
      %359 = vmatprep.subr.mxu0 0.0
      %360 = vmatpush2.msra.mxu0 0.0
      %361 = vmatprep.subr.mxu0 0.0
      %362 = vmatpush2.msra.mxu0 0.0
      %363 = vmatprep.subr.mxu0 %v307
      %364 = vmatpush2.msra.mxu0 %v304
      %365 = vmatprep.subr.mxu0 %v226
      %366 = vmatpush2.msra.mxu0 %v225
      %367 = vmatprep.subr.mxu0 %v224
      %368 = vmatpush2.msra.mxu0 %v223
      %369 = vmatprep.subr.mxu0 %v222
      %370 = vmatpush2.msra.mxu0 %v221
      %371 = vmatprep.subr.mxu0 %v220
      %372 = vmatpush2.msra.mxu0 %v219
      %373 = vmatprep.mubr.f32.mxu0 %v279
      %374 = vmatmul.mubr.f32.gmra.mxu0 %v171
      %v375 = vpop.f32.mrf.mxu0
      %v376 = vadd.f32 %v240, %v375
      %v377 = vpop.f32.mrf.mxu0
      %v378 = vadd.f32 %v240, %v377
      %379 = vmatprep.mubr.f32.mxu0 %v282
      %380 = vmatmul.mubr.f32.gmra.mxu0 %v173
      %v381 = vpop.f32.mrf.mxu0
      %v382 = vadd.f32 %v245, %v381
      %v383 = vpop.f32.mrf.mxu0
      %v384 = vadd.f32 %v245, %v383
      %385 = vmatprep.mubr.f32.mxu0 %v285
      %386 = vmatmul.mubr.f32.gmra.mxu0 %v175
      %v387 = vpop.f32.mrf.mxu0
      %v388 = vadd.f32 %v250, %v387
      %v389 = vpop.f32.mrf.mxu0
      %v390 = vadd.f32 %v250, %v389
      %391 = vmatprep.mubr.f32.mxu0 %v288
      %392 = vmatmul.mubr.f32.gmra.mxu0 %v177
      %v393 = vpop.f32.mrf.mxu0
      %v394 = vadd.f32 %v255, %v393
      %v395 = vpop.f32.mrf.mxu0
      %v396 = vadd.f32 %v255, %v395
      %397 = vmatprep.mubr.f32.mxu0 %v291
      %398 = vmatmul.mubr.f32.gmra.mxu0 %v179
      %v399 = vpop.f32.mrf.mxu0
      %v400 = vadd.f32 %v260, %v399
      %v401 = vpop.f32.mrf.mxu0
      %v402 = vadd.f32 %v260, %v401
      %403 = vmatprep.mubr.f32.mxu0 %v294
      %404 = vmatmul.mubr.f32.gmra.mxu0 %v181
      %v405 = vpop.f32.mrf.mxu0
      %v406 = vadd.f32 %v265, %v405
      %v407 = vpop.f32.mrf.mxu0
      %v408 = vadd.f32 %v265, %v407
      %409 = vmatprep.mubr.f32.mxu0 %v297
      %410 = vmatmul.mubr.f32.gmra.mxu0 %v183
      %v411 = vpop.f32.mrf.mxu0
      %v412 = vadd.f32 %v270, %v411
      %v413 = vpop.f32.mrf.mxu0
      %v414 = vadd.f32 %v270, %v413
      %415 = vmatprep.mubr.f32.mxu0 %v300
      %416 = vmatmul.mubr.f32.gmra.mxu0 %v185
      %v417 = vpop.f32.mrf.mxu0
      %v418 = vadd.f32 %v275, %v417
      %v419 = vpop.f32.mrf.mxu0
      %v420 = vadd.f32 %v275, %v419
      %421 = vdwg.mxu0
      %vm422 = vcmp.gt.f32.partialorder %v376, 0.0
      %vm423 = vcmp.gt.f32.partialorder %v378, 0.0
      %vm424 = vcmp.gt.f32.partialorder %v382, 0.0
      %vm425 = vcmp.gt.f32.partialorder %v384, 0.0
      %vm426 = vcmp.gt.f32.partialorder %v388, 0.0
      %vm427 = vcmp.gt.f32.partialorder %v390, 0.0
      %vm428 = vcmp.gt.f32.partialorder %v394, 0.0
      %vm429 = vcmp.gt.f32.partialorder %v396, 0.0
      %vm430 = vcmp.gt.f32.partialorder %v400, 0.0
      %vm431 = vcmp.gt.f32.partialorder %v402, 0.0
      %vm432 = vcmp.gt.f32.partialorder %v406, 0.0
      %vm433 = vcmp.gt.f32.partialorder %v408, 0.0
      %vm434 = vcmp.gt.f32.partialorder %v412, 0.0
      %vm435 = vcmp.gt.f32.partialorder %v414, 0.0
      %vm436 = vcmp.gt.f32.partialorder %v418, 0.0
      %vm437 = vcmp.gt.f32.partialorder %v420, 0.0
      %v438 = vmin.f32 %v376, 0.0
      %v439 = vmin.f32 %v378, 0.0
      %v440 = vmin.f32 %v382, 0.0
      %v441 = vmin.f32 %v384, 0.0
      %v442 = vmin.f32 %v388, 0.0
      %v443 = vmin.f32 %v390, 0.0
      %v444 = vmin.f32 %v394, 0.0
      %v445 = vmin.f32 %v396, 0.0
      %v446 = vmin.f32 %v400, 0.0
      %v447 = vmin.f32 %v402, 0.0
      %v448 = vmin.f32 %v406, 0.0
      %v449 = vmin.f32 %v408, 0.0
      %v450 = vmin.f32 %v412, 0.0
      %v451 = vmin.f32 %v414, 0.0
      %v452 = vmin.f32 %v418, 0.0
      %v453 = vmin.f32 %v420, 0.0
      %v454 = vmul.f32 %v438, 1.442695
      %v455 = vpow.pop %v454
      %v456 = vmul.f32 %v439, 1.442695
      %v457 = vpow.pop %v456
      %v458 = vmul.f32 %v440, 1.442695
      %v459 = vpow.pop %v458
      %v460 = vmul.f32 %v441, 1.442695
      %v461 = vpow.pop %v460
      %v462 = vmul.f32 %v442, 1.442695
      %v463 = vpow.pop %v462
      %v464 = vmul.f32 %v443, 1.442695
      %v465 = vpow.pop %v464
      %v466 = vmul.f32 %v444, 1.442695
      %v467 = vpow.pop %v466
      %v468 = vmul.f32 %v445, 1.442695
      %v469 = vpow.pop %v468
      %v470 = vmul.f32 %v446, 1.442695
      %v471 = vpow.pop %v470
      %v472 = vmul.f32 %v447, 1.442695
      %v473 = vpow.pop %v472
      %v474 = vmul.f32 %v448, 1.442695
      %v475 = vpow.pop %v474
      %v476 = vmul.f32 %v449, 1.442695
      %v477 = vpow.pop %v476
      %v478 = vmul.f32 %v450, 1.442695
      %v479 = vpow.pop %v478
      %v480 = vmul.f32 %v451, 1.442695
      %v481 = vpow.pop %v480
      %v482 = vmul.f32 %v452, 1.442695
      %v483 = vpow.pop %v482
      %v484 = vmul.f32 %v453, 1.442695
      %v485 = vpow.pop %v484
      %v486 = vsub.f32 %v455, 1.0
      %v487 = vsub.f32 %v457, 1.0
      %v488 = vsub.f32 %v459, 1.0
      %v489 = vsub.f32 %v461, 1.0
      %v490 = vsub.f32 %v463, 1.0
      %v491 = vsub.f32 %v465, 1.0
      %v492 = vsub.f32 %v467, 1.0
      %v493 = vsub.f32 %v469, 1.0
      %v494 = vsub.f32 %v471, 1.0
      %v495 = vsub.f32 %v473, 1.0
      %v496 = vsub.f32 %v475, 1.0
      %v497 = vsub.f32 %v477, 1.0
      %v498 = vsub.f32 %v479, 1.0
      %v499 = vsub.f32 %v481, 1.0
      %v500 = vsub.f32 %v483, 1.0
      %v501 = vsub.f32 %v485, 1.0
      %v502 = vsel %vm422, %v376, %v486
      %v503 = vsel %vm423, %v378, %v487
      %v504 = vsel %vm424, %v382, %v488
      %v505 = vsel %vm425, %v384, %v489
      %v506 = vsel %vm426, %v388, %v490
      %v507 = vsel %vm427, %v390, %v491
      %v508 = vsel %vm428, %v394, %v492
      %v509 = vsel %vm429, %v396, %v493
      %v510 = vsel %vm430, %v400, %v494
      %v511 = vsel %vm431, %v402, %v495
      %v512 = vsel %vm432, %v406, %v496
      %v513 = vsel %vm433, %v408, %v497
      %v514 = vsel %vm434, %v412, %v498
      %v515 = vsel %vm435, %v414, %v499
      %v516 = vsel %vm436, %v418, %v500
      %v517 = vsel %vm437, %v420, %v501
      %518 = vst [vmem:[%s170] sm:$0xff] %v502
      %519 = vst [vmem:[%s170 + $0x8] sm:$0xff] %v503
      %520 = vst [vmem:[%s170 + $0x10] sm:$0xff] %v504
      %521 = vst [vmem:[%s170 + $0x18] sm:$0xff] %v505
      %522 = vst [vmem:[%s170 + $0x20] sm:$0xff] %v506
      %523 = vst [vmem:[%s170 + $0x28] sm:$0xff] %v507
      %524 = vst [vmem:[%s170 + $0x30] sm:$0xff] %v508
      %525 = vst [vmem:[%s170 + $0x38] sm:$0xff] %v509
      %526 = vst [vmem:[%s170 + $0x40] sm:$0xff] %v510
      %527 = vst [vmem:[%s170 + $0x48] sm:$0xff] %v511
      %528 = vst [vmem:[%s170 + $0x50] sm:$0xff] %v512
      %529 = vst [vmem:[%s170 + $0x58] sm:$0xff] %v513
      %530 = vst [vmem:[%s170 + $0x60] sm:$0xff] %v514
      %531 = vst [vmem:[%s170 + $0x68] sm:$0xff] %v515
      %532 = vst [vmem:[%s170 + $0x70] sm:$0xff] %v516
      %533 = vst [vmem:[%s170 + $0x78] sm:$0xff] %v517
      %p534 = scmp.lt.s32.totalorder %s14, 1
      %s535 = scalar_select %p534, %s14, 1
      %s536 = smul.addr %s535, 16
      %s537 = smul.addr %s536, 8
      %s538 = scalar_lea.vmem %s3, %s537
      // Predicated region
      $region33: #{unpack_block_forward.3} parent=31 // pred_check
        %p539 = pneg %p100
      $region34: #{unpack_block_forward.3} parent=31 // pred_check_branch
        %541 = sbr.rel (%p539) target = $region36
      $region35: #{unpack_block_forward.3} parent=31 // pred_region
        _
      $region36: #{unpack_block_forward.3} parent=31 // pred_fallthru
        _
    $region32: #{unpack_block_forward.3} parent=5 // pred_fallthru
      _
    %p542 = scmp.le.s32.totalorder 2, %s9
    // Predicated region
    $region37: #{unpack_block_forward.3} parent=5 // pred_check
      %p543 = pneg %p542
    $region38: #{unpack_block_forward.3} parent=5 // pred_check_branch
      %545 = sbr.rel (%p543) target = $region40
    $region39: #{unpack_block_forward.3} parent=5 // pred_region
      %s546 = ssub.s32 %s9, 2
      // Predicated region
      $region41: #{unpack_block_forward.3} parent=39 // pred_check
        %p547 = pneg %p106
      $region42: #{unpack_block_forward.3} parent=39 // pred_check_branch
        %549 = sbr.rel (%p547) target = $region44
      $region43: #{unpack_block_forward.3} parent=39 // pred_region
        %p550 = scmp.lt.s32.totalorder %s15, 1
        %s551 = scalar_select %p550, %s15, 1
        %s552 = smul.addr %s551, 16
        %s553 = smul.addr %s552, 8
        %s554 = scalar_lea.vmem %s3, %s553
      $region44: #{unpack_block_forward.3} parent=39 // pred_fallthru
        _
    $region40: #{unpack_block_forward.3} parent=5 // pred_fallthru
      _
  $region6: #{unpack_block_forward.3} parent=0 // loop_footer
    %s13 = sadd.s32 1, %s9
  $region7: #{unpack_block_forward.3} parent=0 // loop_footer_branch
    %8 = sbr.rel target = $region3
  $region8: #{unpack_block_forward.3} parent=0 // loop_exit
    _

</llo_original>
